<compile_context>
chip_gen: v7x
topology: tpu7x:2x2x1
jax: 0.10.0
libtpu: 0.0.40
codegen_flags: <defaults>
</compile_context>

<pallas_src>
import functools
import math

import jax
import jax.numpy as jnp
from jax.experimental import pallas as pl
from jax.experimental.pallas import tpu as pltpu


_TM_MAX = 1024                  # sublane tile cap (multiple of 8)
_TN_MAX = 1024                  # lane tile cap (multiple of 128)
_BLOCK_BYTES = 2 * 1024 * 1024  # per-operand block budget (double-buffered by Pallas)
_LANE_DENSE = 1024              # lane width for the free lane-dense reshape
_MIN_PALLAS_ELEMS = 64 * 1024   # below this, a fused XLA elementwise op is faster
_VMEM_LIMIT = 32 * 1024 * 1024  # explicit scoped-VMEM limit (safe on v5e/v6e/v7x)


def _param_loss_kernel(out_ref, gt_ref, valid_ref, loss_ref, *, compute_dtype):
    # Elementwise: |param_out - param_gt| * valid.
    # valid_ref block is either (tm, tn) or (tm, 1); the latter broadcasts over lanes.
    o = out_ref[...].astype(compute_dtype)
    g = gt_ref[...].astype(compute_dtype)
    v = valid_ref[...].astype(compute_dtype)
    loss_ref[...] = (jnp.abs(o - g) * v).astype(loss_ref.dtype)


def param_loss(param_out, param_gt, valid, use_pallas=None):
    """Pallas implementation of ParamLoss.forward:
    torch.abs(param_out - param_gt) * valid, with numpy-style broadcasting."""
    out_dtype = jnp.result_type(param_out.dtype, param_gt.dtype, valid.dtype)
    shape = jnp.broadcast_shapes(param_out.shape, param_gt.shape, valid.shape)
    total = math.prod(shape) if shape else 1

    if use_pallas is None:
        use_pallas = total >= _MIN_PALLAS_ELEMS
    if not use_pallas:
        # Tiny tensors: let XLA fuse the elementwise op with its neighbors.
        return (jnp.abs(param_out.astype(out_dtype) - param_gt.astype(out_dtype))
                * valid.astype(out_dtype))

    # ---- build a 2D (rows, cols) view: last dim -> lanes -------------------
    if len(shape) == 0:
        rows, cols = 1, 1
    elif len(shape) == 1:
        rows, cols = 1, shape[0]
    else:
        rows, cols = math.prod(shape[:-1]), shape[-1]

    # Can `valid` stay at (rows, 1) and be broadcast over the lane axis in-kernel?
    if valid.ndim == 0:
        lane_broadcast = True
    else:
        v_aligned = (1,) * (len(shape) - valid.ndim) + tuple(valid.shape)
        lane_broadcast = v_aligned[-1] == 1

    def to2d(x, r, c):
        # reshape is free when x already has the full broadcast shape (common case)
        if tuple(x.shape) != tuple(shape):
            x = jnp.broadcast_to(x, shape)
        return x.reshape(r, c)

    if lane_broadcast:
        # Keep natural layout; valid stays at (rows, 1) -> ~25% less HBM traffic.
        po2 = to2d(param_out, rows, cols)
        pg2 = to2d(param_gt, rows, cols)
        vshape = shape[:-1] + (1,) if shape else (1,)
        vd2 = jnp.broadcast_to(valid, vshape).reshape(rows, 1)
        valid_cols = 1
    else:
        # valid is full-size anyway; take a lane-dense view when the reshape is free.
        if cols < 128 and total % _LANE_DENSE == 0:
            rows, cols = total // _LANE_DENSE, _LANE_DENSE
        po2 = to2d(param_out, rows, cols)
        pg2 = to2d(param_gt, rows, cols)
        vd2 = to2d(valid, rows, cols)
        valid_cols = cols

    # ---- tiling: full-extent or (8,128)-aligned blocks; ragged tails masked -
    itemsize = max(jnp.dtype(d).itemsize
                   for d in (param_out.dtype, param_gt.dtype, valid.dtype, out_dtype))
    budget_elems = max(8 * 128, _BLOCK_BYTES // itemsize)

    tn = cols if cols <= _TN_MAX else _TN_MAX                 # full dim or multiple of 128
    tm_cap = min(_TM_MAX, max(8, (budget_elems // tn) // 8 * 8))
    tm = rows if rows <= tm_cap else tm_cap                    # full dim or multiple of 8
    grid = (pl.cdiv(rows, tm), pl.cdiv(cols, tn))

    io_spec = pl.BlockSpec((tm, tn), lambda i, j: (i, j))
    if valid_cols == 1:
        valid_spec = pl.BlockSpec((tm, 1), lambda i, j: (i, 0))
    else:
        valid_spec = io_spec

    # Keep VPU math in f32 for low-precision floats (v5e has no bf16 VALU).
    if jnp.issubdtype(out_dtype, jnp.floating) and jnp.dtype(out_dtype).itemsize < 4:
        compute_dtype = jnp.float32
    else:
        compute_dtype = out_dtype

    loss2 = pl.pallas_call(
        functools.partial(_param_loss_kernel, compute_dtype=compute_dtype),
        out_shape=jax.ShapeDtypeStruct((rows, cols), out_dtype),
        grid=grid,
        in_specs=[io_spec, io_spec, valid_spec],
        out_specs=io_spec,
        compiler_params=pltpu.CompilerParams(
            dimension_semantics=("parallel", "parallel"),
            vmem_limit_bytes=_VMEM_LIMIT),
    )(po2, pg2, vd2)

    return loss2.reshape(shape)


if __name__ == "__main__":
    key = jax.random.PRNGKey(0)
    k1, k2, k3 = jax.random.split(key, 3)

    # SMPL-style parameter regression: batch=2, param_dim=72
    B, D = 2, 72
    param_out = jax.random.normal(k1, (B, D), dtype=jnp.float32)
    param_gt = jax.random.normal(k2, (B, D), dtype=jnp.float32)
    valid = (jax.random.uniform(k3, (B, 1)) > 0.3).astype(jnp.float32)

    ref = jnp.abs(param_out - param_gt) * valid

    # 1) tiny-input path (fused XLA fallback)
    loss_small = param_loss(param_out, param_gt, valid)
    jax.block_until_ready(loss_small)
    assert loss_small.shape == ref.shape
    assert jnp.allclose(loss_small, ref, atol=1e-6), "fallback mismatch"

    # 2) Pallas kernel at the same small shape (forced)
    loss_pallas = param_loss(param_out, param_gt, valid, use_pallas=True)
    jax.block_until_ready(loss_pallas)
    assert jnp.allclose(loss_pallas, ref, atol=1e-6), "pallas (small) mismatch"

    # 3) Pallas tiled path with (rows, 1) valid broadcast in-kernel (auto-selected)
    B2 = 1024
    po_big = jax.random.normal(k1, (B2, D), dtype=jnp.float32)
    pg_big = jax.random.normal(k2, (B2, D), dtype=jnp.float32)
    vd_big = (jax.random.uniform(k3, (B2, 1)) > 0.3).astype(jnp.float32)
    loss_big = param_loss(po_big, pg_big, vd_big)
    jax.block_until_ready(loss_big)
    assert jnp.allclose(loss_big, jnp.abs(po_big - pg_big) * vd_big, atol=1e-6), \
        "pallas (tiled, lane-broadcast valid) mismatch"

    # 4) Pallas path with full-shape valid (lane-dense reshape branch)
    vd_full = (jax.random.uniform(k3, (B2, D)) > 0.3).astype(jnp.float32)
    loss_full = param_loss(po_big, pg_big, vd_full, use_pallas=True)
    jax.block_until_ready(loss_full)
    assert jnp.allclose(loss_full, jnp.abs(po_big - pg_big) * vd_full, atol=1e-6), \
        "pallas (lane-dense, full valid) mismatch"

    # 5) Ragged rows (grid does not divide the row count) -> masked/clamped tail
    B3 = 1500
    po_rag = jax.random.normal(k1, (B3, D), dtype=jnp.float32)
    pg_rag = jax.random.normal(k2, (B3, D), dtype=jnp.float32)
    vd_rag = (jax.random.uniform(k3, (B3, 1)) > 0.3).astype(jnp.float32)
    loss_rag = param_loss(po_rag, pg_rag, vd_rag)
    jax.block_until_ready(loss_rag)
    assert jnp.allclose(loss_rag, jnp.abs(po_rag - pg_rag) * vd_rag, atol=1e-6), \
        "pallas (ragged rows) mismatch"

    print("KERNEL_OK")
</pallas_src>

<mosaic_0001>
module attributes {stable_mosaic.version = 11 : i64} {
  func.func @_param_loss_kernel(%arg0: i32, %arg1: i32, %arg2: memref<2x72xf32, #tpu.memory_space<vmem>>, %arg3: memref<2x72xf32, #tpu.memory_space<vmem>>, %arg4: memref<2x1xf32, #tpu.memory_space<vmem>>, %arg5: memref<2x72xf32, #tpu.memory_space<vmem>>) attributes {dimension_semantics = [#tpu.dimension_semantics<parallel>, #tpu.dimension_semantics<parallel>], iteration_bounds = array<i64: 1, 1>, scalar_prefetch = 0 : i64, scratch_operands = 0 : i64, tpu.core_type = #tpu.core_type<tc>, window_params = [{transform_indices = @transform_0, window_bounds = array<i64: 2, 72>}, {transform_indices = @transform_1, window_bounds = array<i64: 2, 72>}, {transform_indices = @transform_2, window_bounds = array<i64: 2, 1>}, {transform_indices = @transform_3, window_bounds = array<i64: 2, 72>}]} {
    %c0 = arith.constant 0 : index
    %c0_0 = arith.constant 0 : index
    %0 = vector.load %arg2[%c0, %c0_0] : memref<2x72xf32, #tpu.memory_space<vmem>>, vector<2x72xf32>
    %c0_1 = arith.constant 0 : index
    %c0_2 = arith.constant 0 : index
    %1 = vector.load %arg3[%c0_1, %c0_2] : memref<2x72xf32, #tpu.memory_space<vmem>>, vector<2x72xf32>
    %c0_3 = arith.constant 0 : index
    %c0_4 = arith.constant 0 : index
    %2 = vector.load %arg4[%c0_3, %c0_4] : memref<2x1xf32, #tpu.memory_space<vmem>>, vector<2x1xf32>
    %3 = arith.subf %0, %1 : vector<2x72xf32>
    %4 = math.absf %3 : vector<2x72xf32>
    %5 = vector.broadcast %2 : vector<2x1xf32> to vector<2x72xf32>
    %6 = arith.mulf %4, %5 : vector<2x72xf32>
    %c0_5 = arith.constant 0 : index
    %c0_6 = arith.constant 0 : index
    %7 = vector.load %arg5[%c0_5, %c0_6] : memref<2x72xf32, #tpu.memory_space<vmem>>, vector<2x72xf32>
    tpu.vector_store %arg5[%c0_5, %c0_6], %6 {strides = array<i32>} : memref<2x72xf32, #tpu.memory_space<vmem>>, vector<2x72xf32>,
    return
  }
  func.func @transform_0(%arg0: i32, %arg1: i32) -> (i32, i32) {
    %c0_i32 = arith.constant 0 : i32
    return %arg0, %arg1 : i32, i32
  }
  func.func @transform_1(%arg0: i32, %arg1: i32) -> (i32, i32) {
    %c0_i32 = arith.constant 0 : i32
    return %arg0, %arg1 : i32, i32
  }
  func.func @transform_2(%arg0: i32, %arg1: i32) -> (i32, i32) {
    %c0_i32 = arith.constant 0 : i32
    %c0_i32_0 = arith.constant 0 : i32
    return %arg0, %c0_i32 : i32, i32
  }
  func.func @transform_3(%arg0: i32, %arg1: i32) -> (i32, i32) {
    %c0_i32 = arith.constant 0 : i32
    return %arg0, %arg1 : i32, i32
  }
}

</mosaic_0001>

<llo_original>
// kernel: tpu_custom_call.1
$region0: #{tpu_custom_call.1}
  #allocation0 [shape = 'u32[]', space=smem, size = 0x4, offset = 0x4, fixed_abs, tag = 'smem constant byte address 0x4 - core index']
  #allocation1 [shape = 'u32[144,128]{1,0:T(1,128)}', space=vmem, size = 0x12000, scoped, tag = 'internal scratch']
  %s0 = inlined_call_operand.vmem [shape: f32[2,72], index: 0, kind: input, shape index: {}]
  %s1 = inlined_call_operand.vmem [shape: f32[2,72], index: 1, kind: input, shape index: {}]
  %s2 = inlined_call_operand.vmem [shape: f32[2,1], index: 2, kind: input, shape index: {}]
  %s3 = inlined_call_operand.hbm [shape: f32[2,72], index: 3, kind: output, shape index: {}]
  %s4 = sld [smem:[#allocation0]]
  $region22: #{tpu_custom_call.1} parent=0
    _
  %s6 = ssub.s32 1, %s4
  %s7 = scalar_select 0, %s6, %s4
  $region1: #{tpu_custom_call.1} parent=0
    #allocation2 [shape = 'u8[1024]{0}', space=vmem, size = 0x400, scoped, tag = 'output window, operand 0, single buffered']
    #allocation3 [shape = 's32[1]{0}', space=sflag, size = 0x4, scoped, tag = 'scoped memory for tpu_custom_call.1']
    %8 = vsyncpa [#allocation3], 0
    // Predicated region
    $region2: #{tpu_custom_call.1} parent=1 // pred_check
      _
    $region3: #{tpu_custom_call.1} parent=1 // pred_check_branch
      %10 = sbr.rel (0) target = $region5
    $region4: #{tpu_custom_call.1} parent=1 // pred_region
      _
    $region5: #{tpu_custom_call.1} parent=1 // pred_fallthru
      _
    // Predicated region
    $region6: #{tpu_custom_call.1} parent=1 // pred_check
      _
    $region7: #{tpu_custom_call.1} parent=1 // pred_check_branch
      %12 = sbr.rel (0) target = $region9
    $region8: #{tpu_custom_call.1} parent=1 // pred_region
      _
    $region9: #{tpu_custom_call.1} parent=1 // pred_fallthru
      _
    // Predicated region
    $region10: #{tpu_custom_call.1} parent=1 // pred_check
      _
    $region11: #{tpu_custom_call.1} parent=1 // pred_check_branch
      %14 = sbr.rel (0) target = $region13
    $region12: #{tpu_custom_call.1} parent=1 // pred_region
      _
    $region13: #{tpu_custom_call.1} parent=1 // pred_fallthru
      _
    %v15 = vld [vmem:[%s0] sm:$0x3]
    %v16 = vld [vmem:[%s1] sm:$0x3]
    %v17 = vld [vmem:[%s2] sm:$0x3]
    %v18 = vsub.f32 %v15, %v16
    %v19 = vand.u32 2147483647, %v18
    %21 = vset.pattern.permute.xlu0 0
    %22 = vperm.xlu0 %21, %v17
    %v23 = vpop.permute.xlu0 %22
    %v25 = vmul.f32 %v19, %v23
    %vm26 = vcmask 582656
    %27 = vst.msk [vmem:[#allocation2] sm:$0x3] %vm26, %v25
    // Predicated region
    $region14: #{tpu_custom_call.1} parent=1 // pred_check
      _
    $region15: #{tpu_custom_call.1} parent=1 // pred_check_branch
      %29 = sbr.rel (0) target = $region17
    $region16: #{tpu_custom_call.1} parent=1 // pred_region
      %s31 = ssub.s32 32, 32
      %32 = vsyncadd [#allocation3], %s31
      %s34 = sshll.u32 [#allocation2], 4
      %s35 = int_to_ptr.vmem [resolvable:$true] %s34
      %37 = dma.vmem_to_hbm [thread:$0]  %s35, 32, %s3, [#allocation3]
    $region17: #{tpu_custom_call.1} parent=1 // pred_fallthru
      _
    // Predicated region
    $region18: #{tpu_custom_call.1} parent=1 // pred_check
      _
    $region19: #{tpu_custom_call.1} parent=1 // pred_check_branch
      %39 = sbr.rel (0) target = $region21
    $region20: #{tpu_custom_call.1} parent=1 // pred_region
      %40 = dma.done [#allocation3], 32
    $region21: #{tpu_custom_call.1} parent=1 // pred_fallthru
      _
    %41 = vsyncpa [#allocation3], 1

</llo_original>
